<compile_context>
chip_gen: v7x
topology: tpu7x:2x2x1
jax: 0.10.0
libtpu: 0.0.40
codegen_flags: <defaults>
</compile_context>

<pallas_src>
import jax
import jax.numpy as jnp
from jax.experimental import pallas as pl
from jax.experimental.pallas import tpu as pltpu

_LANE_W = 1024            # lane-dense last dim (multiple of 128 -> unmasked vst)
_MAX_TILE_ROWS = 512      # 512 x 1024 f32 = 2 MiB per block (safe on v5e/v6e/v7x)
_TARGET_BLOCKS = 4        # keep >=4 blocks for mid-size N so v7x's 2 TCs share work
_SMALL_N = 8 * _LANE_W    # below this, skip Pallas entirely (launch overhead wins)


def _linear_kernel(w_ref, b_ref, x_ref, o_ref):
    # (1, 1) f32 scalars in SMEM — essentially free reads.
    w = w_ref[0, 0]
    b = b_ref[0, 0]
    # DMA-bound kernel: compute in f32 (safe on v5e's no-bf16 VPU; the VALU slot
    # has huge slack on v6e/v7x so the casts are free), store in caller's dtype.
    xv = x_ref[...].astype(jnp.float32)
    o_ref[...] = (xv * w + b).astype(o_ref.dtype)


def linear_regression_v2(x, weight, bias):
    """Forward pass of LinearRegressionModelV2: y = x @ weight.T + bias.

    x: (N, 1) float; weight: (1, 1); bias: (1,). Returns (N, 1).
    """
    n = x.shape[0]
    out_dtype = x.dtype

    w_scalar = weight.reshape(()).astype(jnp.float32)
    b_scalar = bias.reshape(()).astype(jnp.float32)

    # --- tiny-N fast path: a fused XLA elementwise op is strictly cheaper.
    if n < _SMALL_N:
        y = (x.astype(jnp.float32) * w_scalar + b_scalar).astype(out_dtype)
        return y.reshape(n, 1)

    x_flat = x.reshape(-1)

    # Bulk = largest multiple of the lane width; the ragged tail (<1024 elems)
    # is handled by a tiny XLA op instead of padding/slicing the whole array.
    n_bulk = (n // _LANE_W) * _LANE_W
    rows = n_bulk // _LANE_W
    x2d = x_flat[:n_bulk].reshape(rows, _LANE_W)      # no padding of the slab

    # Tile rows: multiple of 8, capped at 2 MiB blocks, and small enough that
    # medium inputs keep >= _TARGET_BLOCKS grid steps (v7x megacore sharding).
    tile_rows = min(
        _MAX_TILE_ROWS,
        max(8, ((pl.cdiv(rows, _TARGET_BLOCKS) + 7) // 8) * 8),
    )
    grid = (pl.cdiv(rows, tile_rows),)   # partial last block is masked by Pallas

    w_smem = weight.reshape(1, 1).astype(jnp.float32)
    b_smem = bias.reshape(1, 1).astype(jnp.float32)

    y2d = pl.pallas_call(
        _linear_kernel,
        out_shape=jax.ShapeDtypeStruct((rows, _LANE_W), out_dtype),
        grid=grid,
        in_specs=[
            pl.BlockSpec(memory_space=pltpu.SMEM),               # weight scalar
            pl.BlockSpec(memory_space=pltpu.SMEM),               # bias scalar
            pl.BlockSpec((tile_rows, _LANE_W), lambda i: (i, 0)),
        ],
        out_specs=pl.BlockSpec((tile_rows, _LANE_W), lambda i: (i, 0)),
        compiler_params=pltpu.CompilerParams(
            # Embarrassingly parallel stream: lets v7x shard the grid across its
            # two TensorCores; harmless on single-TC chips.
            dimension_semantics=("parallel",),
        ),
    )(w_smem, b_smem, x2d)

    y_bulk = y2d.reshape(-1)

    if n_bulk == n:
        # Multiple-of-1024 inputs: zero extra wrapper passes (reshapes only).
        return y_bulk.reshape(n, 1)

    # Ragged tail (<1024 elements) computed in plain XLA.
    x_tail = x_flat[n_bulk:]
    y_tail = (x_tail.astype(jnp.float32) * w_scalar + b_scalar).astype(out_dtype)
    return jnp.concatenate([y_bulk, y_tail]).reshape(n, 1)


if __name__ == "__main__":
    # Deterministic parameters (nn.Linear(1, 1) shapes).
    weight = jnp.array([[0.7]], dtype=jnp.float32)  # (out_features, in_features)
    bias = jnp.array([0.3], dtype=jnp.float32)      # (out_features,)

    key = jax.random.PRNGKey(0)
    k1, k2, k3 = jax.random.split(key, 3)

    # Case 1: tiny batch (nn.Linear demo scale) -> exercises the XLA fast path.
    x_small = jax.random.normal(k1, (8, 1), dtype=jnp.float32)
    y_small = jax.block_until_ready(linear_regression_v2(x_small, weight, bias))
    assert y_small.shape == (8, 1)
    assert jnp.allclose(y_small, x_small @ weight.T + bias, atol=1e-6), \
        "mismatch vs reference (N=8)"

    # Case 2: lane-multiple N -> Pallas path with no pad/slice/concat.
    x_bulk = jax.random.normal(k2, (8192, 1), dtype=jnp.float32)
    y_bulk = jax.block_until_ready(linear_regression_v2(x_bulk, weight, bias))
    assert y_bulk.shape == (8192, 1)
    assert jnp.allclose(y_bulk, x_bulk @ weight.T + bias, atol=1e-6), \
        "mismatch vs reference (N=8192)"

    # Case 3: ragged N -> multi-block grid, masked partial last block, XLA tail.
    x_rag = jax.random.normal(k3, (16 * 1024 + 300, 1), dtype=jnp.float32)
    y_rag = jax.block_until_ready(linear_regression_v2(x_rag, weight, bias))
    assert y_rag.shape == (16 * 1024 + 300, 1)
    assert jnp.allclose(y_rag, x_rag @ weight.T + bias, atol=1e-6), \
        "mismatch vs reference (ragged N)"

    print("KERNEL_OK")
</pallas_src>

<mosaic_0001>
module attributes {stable_mosaic.version = 11 : i64} {
  func.func @_linear_kernel(%arg0: i32, %arg1: memref<1x1xf32, #tpu.memory_space<smem>>, %arg2: memref<1x1xf32, #tpu.memory_space<smem>>, %arg3: memref<8x1024xf32, #tpu.memory_space<vmem>>, %arg4: memref<8x1024xf32, #tpu.memory_space<vmem>>) attributes {dimension_semantics = [#tpu.dimension_semantics<parallel>], iteration_bounds = array<i64: 1>, scalar_prefetch = 0 : i64, scratch_operands = 0 : i64, tpu.core_type = #tpu.core_type<tc>, window_params = [{transform_indices = @transform_0, window_bounds = array<i64: 1, 1>}, {transform_indices = @transform_1, window_bounds = array<i64: 1, 1>}, {transform_indices = @transform_2, window_bounds = array<i64: 8, 1024>}, {transform_indices = @transform_3, window_bounds = array<i64: 8, 1024>}]} {
    %c0 = arith.constant 0 : index
    %c0_0 = arith.constant 0 : index
    %0 = memref.load %arg1[%c0, %c0_0] : memref<1x1xf32, #tpu.memory_space<smem>>
    %c0_1 = arith.constant 0 : index
    %c0_2 = arith.constant 0 : index
    %1 = memref.load %arg2[%c0_1, %c0_2] : memref<1x1xf32, #tpu.memory_space<smem>>
    %c0_3 = arith.constant 0 : index
    %c0_4 = arith.constant 0 : index
    %2 = vector.load %arg3[%c0_3, %c0_4] : memref<8x1024xf32, #tpu.memory_space<vmem>>, vector<8x1024xf32>
    %3 = vector.broadcast %0 : f32 to vector<8x1024xf32>
    %4 = arith.mulf %2, %3 : vector<8x1024xf32>
    %5 = vector.broadcast %1 : f32 to vector<8x1024xf32>
    %6 = arith.addf %4, %5 : vector<8x1024xf32>
    %c0_5 = arith.constant 0 : index
    %c0_6 = arith.constant 0 : index
    %7 = vector.load %arg4[%c0_5, %c0_6] : memref<8x1024xf32, #tpu.memory_space<vmem>>, vector<8x1024xf32>
    tpu.vector_store %arg4[%c0_5, %c0_6], %6 {strides = array<i32>} : memref<8x1024xf32, #tpu.memory_space<vmem>>, vector<8x1024xf32>,
    return
  }
  func.func @transform_0(%arg0: i32) -> (i32, i32) {
    %c0_i32 = arith.constant 0 : i32
    %c0_i32_0 = arith.constant 0 : i32
    %c0_i32_1 = arith.constant 0 : i32
    return %c0_i32, %c0_i32_0 : i32, i32
  }
  func.func @transform_1(%arg0: i32) -> (i32, i32) {
    %c0_i32 = arith.constant 0 : i32
    %c0_i32_0 = arith.constant 0 : i32
    %c0_i32_1 = arith.constant 0 : i32
    return %c0_i32, %c0_i32_0 : i32, i32
  }
  func.func @transform_2(%arg0: i32) -> (i32, i32) {
    %c0_i32 = arith.constant 0 : i32
    %c0_i32_0 = arith.constant 0 : i32
    return %arg0, %c0_i32 : i32, i32
  }
  func.func @transform_3(%arg0: i32) -> (i32, i32) {
    %c0_i32 = arith.constant 0 : i32
    %c0_i32_0 = arith.constant 0 : i32
    return %arg0, %c0_i32 : i32, i32
  }
}

</mosaic_0001>

<llo_original>
// kernel: tpu_custom_call.1
$region0: #{tpu_custom_call.1}
  #allocation0 [shape = 'u32[]', space=smem, size = 0x4, offset = 0x4, fixed_abs, tag = 'smem constant byte address 0x4 - core index']
  #allocation1 [shape = 'u32[144,128]{1,0:T(1,128)}', space=vmem, size = 0x12000, scoped, tag = 'internal scratch']
  #allocation2 [shape = 'f32[1,1]{1,0:T(1,128)S(6)}', space=smem, size = 0x200, scoped, tag = 'scoped memory for tpu_custom_call.1']
  #allocation3 [shape = 'f32[1,1]{1,0:T(1,128)S(6)}', space=smem, size = 0x200, scoped, tag = 'scoped memory for tpu_custom_call.1']
  %s0 = inlined_call_operand.<no memory space> [shape: f32[1,1], index: 0, kind: input, shape index: {}]
  %s1 = inlined_call_operand.<no memory space> [shape: f32[1,1], index: 1, kind: input, shape index: {}]
  %s2 = inlined_call_operand.hbm [shape: f32[8,1024], index: 2, kind: input, shape index: {}]
  %s3 = inlined_call_operand.hbm [shape: f32[8,1024], index: 3, kind: output, shape index: {}]
  %s4 = sld [smem:[#allocation0]]
  $region26: #{tpu_custom_call.1} parent=0
    _
  %s6 = ssub.s32 1, %s4
  %s7 = scalar_select 0, %s6, %s4
  %8 = sst [smem:[#allocation2]] %s0
  %9 = sst [smem:[#allocation3]] %s1
  $region1: #{tpu_custom_call.1} parent=0
    #allocation4 [shape = 'u8[32768]{0}', space=vmem, size = 0x8000, scoped, tag = 'input window, operand 2, single buffered']
    #allocation5 [shape = 's32[1]{0}', space=sflag, size = 0x4, scoped, tag = 'scoped memory for tpu_custom_call.1']
    #allocation6 [shape = 's32[1]{0}', space=sflag, size = 0x4, scoped, tag = 'scoped memory for tpu_custom_call.1']
    #allocation7 [shape = 'u8[32768]{0}', space=vmem, size = 0x8000, scoped, tag = 'output window, operand 0, single buffered']
    %10 = vsyncpa [#allocation5], 0
    %11 = vsyncpa [#allocation6], 0
    // Predicated region
    $region2: #{tpu_custom_call.1} parent=1 // pred_check
      _
    $region3: #{tpu_custom_call.1} parent=1 // pred_check_branch
      %13 = sbr.rel (0) target = $region5
    $region4: #{tpu_custom_call.1} parent=1 // pred_region
      _
    $region5: #{tpu_custom_call.1} parent=1 // pred_fallthru
      _
    // Predicated region
    $region6: #{tpu_custom_call.1} parent=1 // pred_check
      _
    $region7: #{tpu_custom_call.1} parent=1 // pred_check_branch
      %15 = sbr.rel (0) target = $region9
    $region8: #{tpu_custom_call.1} parent=1 // pred_region
      _
    $region9: #{tpu_custom_call.1} parent=1 // pred_fallthru
      _
    // Predicated region
    $region10: #{tpu_custom_call.1} parent=1 // pred_check
      _
    $region11: #{tpu_custom_call.1} parent=1 // pred_check_branch
      %17 = sbr.rel (0) target = $region13
    $region12: #{tpu_custom_call.1} parent=1 // pred_region
      %s19 = ssub.s32 1024, 1024
      %20 = vsyncadd [#allocation5], %s19
      %s22 = sshll.u32 [#allocation4], 4
      %s23 = int_to_ptr.vmem [resolvable:$true] %s22
      %25 = dma.hbm_to_vmem [thread:$0]  %s2, 1024, %s23, [#allocation5]
    $region13: #{tpu_custom_call.1} parent=1 // pred_fallthru
      _
    // Predicated region
    $region14: #{tpu_custom_call.1} parent=1 // pred_check
      _
    $region15: #{tpu_custom_call.1} parent=1 // pred_check_branch
      %27 = sbr.rel (0) target = $region17
    $region16: #{tpu_custom_call.1} parent=1 // pred_region
      %28 = dma.done [#allocation5], 1024
    $region17: #{tpu_custom_call.1} parent=1 // pred_fallthru
      _
    %s29 = sld [smem:[#allocation2]]
    %s30 = sld [smem:[#allocation3]]
    %v31 = vld [vmem:[#allocation4] sm:$0xff]
    %v32 = vld [vmem:[#allocation4 + $0x8] sm:$0xff]
    %v33 = vld [vmem:[#allocation4 + $0x10] sm:$0xff]
    %v34 = vld [vmem:[#allocation4 + $0x18] sm:$0xff]
    %v35 = vld [vmem:[#allocation4 + $0x20] sm:$0xff]
    %v36 = vld [vmem:[#allocation4 + $0x28] sm:$0xff]
    %v37 = vld [vmem:[#allocation4 + $0x30] sm:$0xff]
    %v38 = vld [vmem:[#allocation4 + $0x38] sm:$0xff]
    %v39 = vstv %s29
    %v40 = vmul.f32 %v31, %v39
    %v41 = vmul.f32 %v32, %v39
    %v42 = vmul.f32 %v33, %v39
    %v43 = vmul.f32 %v34, %v39
    %v44 = vmul.f32 %v35, %v39
    %v45 = vmul.f32 %v36, %v39
    %v46 = vmul.f32 %v37, %v39
    %v47 = vmul.f32 %v38, %v39
    %v48 = vstv %s30
    %v49 = vadd.f32 %v40, %v48
    %v50 = vadd.f32 %v41, %v48
    %v51 = vadd.f32 %v42, %v48
    %v52 = vadd.f32 %v43, %v48
    %v53 = vadd.f32 %v44, %v48
    %v54 = vadd.f32 %v45, %v48
    %v55 = vadd.f32 %v46, %v48
    %v56 = vadd.f32 %v47, %v48
    %57 = vst [vmem:[#allocation7] sm:$0xff] %v49
    %58 = vst [vmem:[#allocation7 + $0x8] sm:$0xff] %v50
    %59 = vst [vmem:[#allocation7 + $0x10] sm:$0xff] %v51
    %60 = vst [vmem:[#allocation7 + $0x18] sm:$0xff] %v52
    %61 = vst [vmem:[#allocation7 + $0x20] sm:$0xff] %v53
    %62 = vst [vmem:[#allocation7 + $0x28] sm:$0xff] %v54
    %63 = vst [vmem:[#allocation7 + $0x30] sm:$0xff] %v55
    %64 = vst [vmem:[#allocation7 + $0x38] sm:$0xff] %v56
    // Predicated region
    $region18: #{tpu_custom_call.1} parent=1 // pred_check
      _
    $region19: #{tpu_custom_call.1} parent=1 // pred_check_branch
      %66 = sbr.rel (0) target = $region21
    $region20: #{tpu_custom_call.1} parent=1 // pred_region
      %s68 = ssub.s32 1024, 1024
      %69 = vsyncadd [#allocation6], %s68
      %s71 = sshll.u32 [#allocation7], 4
      %s72 = int_to_ptr.vmem [resolvable:$true] %s71
      %74 = dma.vmem_to_hbm [thread:$0]  %s72, 1024, %s3, [#allocation6]
    $region21: #{tpu_custom_call.1} parent=1 // pred_fallthru
      _
    // Predicated region
    $region22: #{tpu_custom_call.1} parent=1 // pred_check
      _
    $region23: #{tpu_custom_call.1} parent=1 // pred_check_branch
      %76 = sbr.rel (0) target = $region25
    $region24: #{tpu_custom_call.1} parent=1 // pred_region
      %77 = dma.done [#allocation6], 1024
    $region25: #{tpu_custom_call.1} parent=1 // pred_fallthru
      _
    %78 = vsyncpa [#allocation5], 1
    %79 = vsyncpa [#allocation6], 1

</llo_original>
